<compile_context>
chip_gen: v7x
topology: tpu7x:2x2x1
jax: 0.10.0
libtpu: 0.0.40
codegen_flags: <defaults>
</compile_context>

<pallas_src>
import jax
import jax.numpy as jnp
from jax.experimental import pallas as pl
from jax.experimental.pallas import tpu as pltpu

KERNEL = 3
STRIDE = 3  # MaxPool2d default: stride = kernel_size


def _maxpool_kernel(xw_ref, o_ref):
    # xw_ref: (KERNEL*KERNEL, tile_h, W_out, NC) -- window taps on the leading axis
    # o_ref : (tile_h, W_out, NC)
    acc = xw_ref[0]
    for t in range(1, xw_ref.shape[0]):      # unrolled: pure VPU elementwise maxima
        acc = jnp.maximum(acc, xw_ref[t])
    o_ref[...] = acc


def _pad_value(dtype):
    if jnp.issubdtype(dtype, jnp.floating):
        return jnp.array(-jnp.inf, dtype)
    return jnp.array(jnp.iinfo(dtype).min, dtype)


@jax.jit
def maxpool2d_ceil(x):
    """x: (N, C, H, W) -> (N, C, H_out, W_out); kernel=stride=3, ceil_mode=True."""
    n, c, h, w = x.shape
    # ceil-mode output size. NOTE: with stride == kernel and zero padding, PyTorch's
    # "last window must start inside the input" correction is always satisfied, so the
    # plain ceil formula is exact for this module's configuration.
    h_out = -(-(h - KERNEL) // STRIDE) + 1
    w_out = -(-(w - KERNEL) // STRIDE) + 1
    h_pad = (h_out - 1) * STRIDE + KERNEL
    w_pad = (w_out - 1) * STRIDE + KERNEL
    nc = n * c

    # --- single fused XLA prologue (pad + window split + channel-last transpose) ---
    neg = _pad_value(x.dtype)
    xp = jnp.pad(
        x,
        ((0, 0), (0, 0), (0, h_pad - h), (0, w_pad - w)),
        mode="constant",
        constant_values=neg,
    )
    # (n, c, h_out, ki, w_out, kj) -> (ki, kj, h_out, w_out, n, c) -> (K*K, h_out, w_out, nc)
    xw = xp.reshape(n, c, h_out, KERNEL, w_out, KERNEL)
    xw = xw.transpose(3, 5, 2, 4, 0, 1).reshape(KERNEL * KERNEL, h_out, w_out, nc)

    # --- grid: 2-way parallel split over output rows when possible (v7x dual TC) ---
    if h_out % 2 == 0:
        grid_h, tile_h = 2, h_out // 2
    else:
        grid_h, tile_h = 1, h_out

    out = pl.pallas_call(
        _maxpool_kernel,
        out_shape=jax.ShapeDtypeStruct((h_out, w_out, nc), x.dtype),
        grid_spec=pltpu.PrefetchScalarGridSpec(
            num_scalar_prefetch=0,
            grid=(grid_h,),
            in_specs=[
                pl.BlockSpec(
                    (KERNEL * KERNEL, tile_h, w_out, nc),
                    lambda i: (0, i, 0, 0),
                )
            ],
            out_specs=pl.BlockSpec((tile_h, w_out, nc), lambda i: (i, 0, 0)),
        ),
        compiler_params=pltpu.CompilerParams(
            dimension_semantics=("parallel",),
        ),
    )(xw)

    # back to NCHW
    return out.reshape(h_out, w_out, n, c).transpose(2, 3, 0, 1)


if __name__ == "__main__":
    key = jax.random.PRNGKey(0)
    x = jax.random.normal(key, (2, 4, 16, 16), dtype=jnp.float32)  # NCHW

    out = maxpool2d_ceil(x)
    out = jax.block_until_ready(out)

    # reference: clipped-window max pool (ceil_mode=True semantics)
    ref = jax.lax.reduce_window(
        x,
        -jnp.inf,
        jax.lax.max,
        window_dimensions=(1, 1, KERNEL, KERNEL),
        window_strides=(1, 1, STRIDE, STRIDE),
        padding=((0, 0), (0, 0), (0, 2), (0, 2)),  # pad up to ceil-mode extent
    )
    assert out.shape == (2, 4, 6, 6), out.shape
    assert jnp.allclose(out, ref), "mismatch vs reference max pool"

    print("KERNEL_OK")
</pallas_src>

<mosaic_0001>
module attributes {stable_mosaic.version = 11 : i64} {
  func.func @_maxpool_kernel(%arg0: i32, %arg1: memref<9x3x6x8xf32, #tpu.memory_space<vmem>>, %arg2: memref<3x6x8xf32, #tpu.memory_space<vmem>>) attributes {dimension_semantics = [#tpu.dimension_semantics<parallel>], iteration_bounds = array<i64: 2>, scalar_prefetch = 0 : i64, scratch_operands = 0 : i64, tpu.core_type = #tpu.core_type<tc>, window_params = [{transform_indices = @transform_0, window_bounds = array<i64: 9, 3, 6, 8>}, {transform_indices = @transform_1, window_bounds = array<i64: 3, 6, 8>}]} {
    %c0 = arith.constant 0 : index
    %c0_0 = arith.constant 0 : index
    %c0_1 = arith.constant 0 : index
    %c0_2 = arith.constant 0 : index
    %0 = vector.load %arg1[%c0, %c0_0, %c0_1, %c0_2] : memref<9x3x6x8xf32, #tpu.memory_space<vmem>>, vector<1x3x6x8xf32>
    %1 = vector.shape_cast %0 : vector<1x3x6x8xf32> to vector<3x6x8xf32>
    %c1 = arith.constant 1 : index
    %c0_3 = arith.constant 0 : index
    %c0_4 = arith.constant 0 : index
    %c0_5 = arith.constant 0 : index
    %2 = vector.load %arg1[%c1, %c0_3, %c0_4, %c0_5] : memref<9x3x6x8xf32, #tpu.memory_space<vmem>>, vector<1x3x6x8xf32>
    %3 = vector.shape_cast %2 : vector<1x3x6x8xf32> to vector<3x6x8xf32>
    %4 = arith.maximumf %1, %3 : vector<3x6x8xf32>
    %c2 = arith.constant 2 : index
    %c0_6 = arith.constant 0 : index
    %c0_7 = arith.constant 0 : index
    %c0_8 = arith.constant 0 : index
    %5 = vector.load %arg1[%c2, %c0_6, %c0_7, %c0_8] : memref<9x3x6x8xf32, #tpu.memory_space<vmem>>, vector<1x3x6x8xf32>
    %6 = vector.shape_cast %5 : vector<1x3x6x8xf32> to vector<3x6x8xf32>
    %7 = arith.maximumf %4, %6 : vector<3x6x8xf32>
    %c3 = arith.constant 3 : index
    %c0_9 = arith.constant 0 : index
    %c0_10 = arith.constant 0 : index
    %c0_11 = arith.constant 0 : index
    %8 = vector.load %arg1[%c3, %c0_9, %c0_10, %c0_11] : memref<9x3x6x8xf32, #tpu.memory_space<vmem>>, vector<1x3x6x8xf32>
    %9 = vector.shape_cast %8 : vector<1x3x6x8xf32> to vector<3x6x8xf32>
    %10 = arith.maximumf %7, %9 : vector<3x6x8xf32>
    %c4 = arith.constant 4 : index
    %c0_12 = arith.constant 0 : index
    %c0_13 = arith.constant 0 : index
    %c0_14 = arith.constant 0 : index
    %11 = vector.load %arg1[%c4, %c0_12, %c0_13, %c0_14] : memref<9x3x6x8xf32, #tpu.memory_space<vmem>>, vector<1x3x6x8xf32>
    %12 = vector.shape_cast %11 : vector<1x3x6x8xf32> to vector<3x6x8xf32>
    %13 = arith.maximumf %10, %12 : vector<3x6x8xf32>
    %c5 = arith.constant 5 : index
    %c0_15 = arith.constant 0 : index
    %c0_16 = arith.constant 0 : index
    %c0_17 = arith.constant 0 : index
    %14 = vector.load %arg1[%c5, %c0_15, %c0_16, %c0_17] : memref<9x3x6x8xf32, #tpu.memory_space<vmem>>, vector<1x3x6x8xf32>
    %15 = vector.shape_cast %14 : vector<1x3x6x8xf32> to vector<3x6x8xf32>
    %16 = arith.maximumf %13, %15 : vector<3x6x8xf32>
    %c6 = arith.constant 6 : index
    %c0_18 = arith.constant 0 : index
    %c0_19 = arith.constant 0 : index
    %c0_20 = arith.constant 0 : index
    %17 = vector.load %arg1[%c6, %c0_18, %c0_19, %c0_20] : memref<9x3x6x8xf32, #tpu.memory_space<vmem>>, vector<1x3x6x8xf32>
    %18 = vector.shape_cast %17 : vector<1x3x6x8xf32> to vector<3x6x8xf32>
    %19 = arith.maximumf %16, %18 : vector<3x6x8xf32>
    %c7 = arith.constant 7 : index
    %c0_21 = arith.constant 0 : index
    %c0_22 = arith.constant 0 : index
    %c0_23 = arith.constant 0 : index
    %20 = vector.load %arg1[%c7, %c0_21, %c0_22, %c0_23] : memref<9x3x6x8xf32, #tpu.memory_space<vmem>>, vector<1x3x6x8xf32>
    %21 = vector.shape_cast %20 : vector<1x3x6x8xf32> to vector<3x6x8xf32>
    %22 = arith.maximumf %19, %21 : vector<3x6x8xf32>
    %c8 = arith.constant 8 : index
    %c0_24 = arith.constant 0 : index
    %c0_25 = arith.constant 0 : index
    %c0_26 = arith.constant 0 : index
    %23 = vector.load %arg1[%c8, %c0_24, %c0_25, %c0_26] : memref<9x3x6x8xf32, #tpu.memory_space<vmem>>, vector<1x3x6x8xf32>
    %24 = vector.shape_cast %23 : vector<1x3x6x8xf32> to vector<3x6x8xf32>
    %25 = arith.maximumf %22, %24 : vector<3x6x8xf32>
    %c0_27 = arith.constant 0 : index
    %c0_28 = arith.constant 0 : index
    %c0_29 = arith.constant 0 : index
    %26 = vector.load %arg2[%c0_27, %c0_28, %c0_29] : memref<3x6x8xf32, #tpu.memory_space<vmem>>, vector<3x6x8xf32>
    tpu.vector_store %arg2[%c0_27, %c0_28, %c0_29], %25 {strides = array<i32>} : memref<3x6x8xf32, #tpu.memory_space<vmem>>, vector<3x6x8xf32>,
    return
  }
  func.func @transform_0(%arg0: i32) -> (i32, i32, i32, i32) {
    %c0_i32 = arith.constant 0 : i32
    %c0_i32_0 = arith.constant 0 : i32
    %c0_i32_1 = arith.constant 0 : i32
    %c0_i32_2 = arith.constant 0 : i32
    return %c0_i32, %arg0, %c0_i32_0, %c0_i32_1 : i32, i32, i32, i32
  }
  func.func @transform_1(%arg0: i32) -> (i32, i32, i32) {
    %c0_i32 = arith.constant 0 : i32
    %c0_i32_0 = arith.constant 0 : i32
    %c0_i32_1 = arith.constant 0 : i32
    return %arg0, %c0_i32, %c0_i32_0 : i32, i32, i32
  }
}

</mosaic_0001>

<llo_original>
// kernel: maxpool2d_ceil.1
$region0: #{maxpool2d_ceil.1}
  #allocation0 [shape = 'u32[]', space=smem, size = 0x4, offset = 0x4, fixed_abs, tag = 'smem constant byte address 0x4 - core index']
  #allocation1 [shape = 'u32[144,128]{1,0:T(1,128)}', space=vmem, size = 0x12000, scoped, tag = 'internal scratch']
  %s0 = inlined_call_operand.vmem [shape: f32[9,6,6,8], index: 0, kind: input, shape index: {}]
  %s1 = inlined_call_operand.vmem [shape: f32[6,6,8], index: 1, kind: output, shape index: {}]
  %s2 = sld [smem:[#allocation0]]
  $region75: #{maxpool2d_ceil.1} parent=0
    _
  %s4 = ssub.s32 1, %s2
  %s5 = scalar_select 0, %s4, %s2
  $region1: #{maxpool2d_ceil.1} parent=0
    #allocation2 [shape = 'u8[221184]{0}', space=vmem, size = 0x36000, scoped, tag = 'input window, operand 0']
    loop: start=0, step=1, limit=4
    $region2: #{maxpool2d_ceil.1} parent=1 // loop_pre_header
      _
    $region3: #{maxpool2d_ceil.1} parent=1 // loop_header
      %s7 = sphi 0, %s11
      %p8 = scmp.ge.s32.totalorder %s7, 4
      %s17 = sphi 0, %s19
      %s20 = sphi 0, %s17
      %s21 = sphi 0, %s20
      %s37 = sphi 0, %s21
      %s43 = sphi 0, %s45
      %s46 = sphi 0, %s43
      %s47 = sphi 0, %s46
      %s63 = sphi 0, %s47
    $region4: #{maxpool2d_ceil.1} parent=1 // loop_header_branch
      %10 = sbr.rel (%p8) target = $region8
    $region5: #{maxpool2d_ceil.1} parent=1 // loop_body
      %s12 = ssub.s32 %s7, 1
      %s13 = ssub.s32 %s7, 2
      %s14 = sadd.s32 %s7, 1
      %s15 = ssub.s32 %s7, %s14
      %p16 = scmp.eq.s32.totalorder %s15, 0
      %s18 = sadd.s32 %s17, 1
      %s19 = scalar_select %p16, %s17, %s18
      %p22 = pneg %p16
      %p23 = scmp.eq.s32.totalorder %s7, 1
      %p24 = por %p22, %p23
      %p25 = scmp.ne.s32.totalorder %s17, %s20
      %p26 = scmp.eq.s32.totalorder %s7, 0
      %p27 = por %p25, %p26
      %p28 = scmp.ne.s32.totalorder %s17, %s20
      %p29 = scmp.eq.s32.totalorder %s12, 1
      %p30 = por %p28, %p29
      %p31 = scmp.ne.s32.totalorder %s20, %s21
      %p32 = scmp.eq.s32.totalorder %s12, 0
      %p33 = por %p31, %p32
      %p34 = scmp.ne.s32.totalorder %s20, %s21
      %p35 = scmp.eq.s32.totalorder %s13, 1
      %p36 = por %p34, %p35
      %p38 = scmp.ne.s32.totalorder %s21, %s37
      %p39 = scmp.eq.s32.totalorder %s13, 0
      %p40 = por %p38, %p39
      %s41 = ssub.s32 %s7, %s14
      %p42 = scmp.eq.s32.totalorder %s41, 0
      %s44 = sadd.s32 %s43, 1
      %s45 = scalar_select %p42, %s43, %s44
      %p48 = pneg %p42
      %p49 = scmp.eq.s32.totalorder %s7, 1
      %p50 = por %p48, %p49
      %p51 = scmp.ne.s32.totalorder %s43, %s46
      %p52 = scmp.eq.s32.totalorder %s7, 0
      %p53 = por %p51, %p52
      %p54 = scmp.ne.s32.totalorder %s43, %s46
      %p55 = scmp.eq.s32.totalorder %s12, 1
      %p56 = por %p54, %p55
      %p57 = scmp.ne.s32.totalorder %s46, %s47
      %p58 = scmp.eq.s32.totalorder %s12, 0
      %p59 = por %p57, %p58
      %p60 = scmp.ne.s32.totalorder %s46, %s47
      %p61 = scmp.eq.s32.totalorder %s13, 1
      %p62 = por %p60, %p61
      %p64 = scmp.ne.s32.totalorder %s47, %s63
      %p65 = scmp.eq.s32.totalorder %s13, 0
      %p66 = por %p64, %p65
      %p67 = scmp.le.s32.totalorder 1, %s7
      %p68 = scmp.lt.s32.totalorder %s7, 3
      %p69 = pnand %p67, %p68
      %p70 = pneg %p69
      // Predicated region
      $region9: #{maxpool2d_ceil.1} parent=5 // pred_check
        _
      $region10: #{maxpool2d_ceil.1} parent=5 // pred_check_branch
        %72 = sbr.rel (%p69) target = $region12
      $region11: #{maxpool2d_ceil.1} parent=5 // pred_region
        %s73 = ssub.s32 %s7, 1
      $region12: #{maxpool2d_ceil.1} parent=5 // pred_fallthru
        _
      %p74 = scmp.lt.s32.totalorder %s7, 2
      // Predicated region
      $region13: #{maxpool2d_ceil.1} parent=5 // pred_check
        %p75 = pneg %p74
      $region14: #{maxpool2d_ceil.1} parent=5 // pred_check_branch
        %77 = sbr.rel (%p75) target = $region16
      $region15: #{maxpool2d_ceil.1} parent=5 // pred_region
        // Predicated region
        $region17: #{maxpool2d_ceil.1} parent=15 // pred_check
          %p78 = pneg %p27
        $region18: #{maxpool2d_ceil.1} parent=15 // pred_check_branch
          %80 = sbr.rel (%p78) target = $region20
        $region19: #{maxpool2d_ceil.1} parent=15 // pred_region
          %s81 = sand.u32 %s17, 1
          %s82 = sand.u32 %s17, 1
          %s83 = smul.addr %s82, 216
          %s84 = scalar_lea.vmem [#allocation2], %s83
          %s85 = smul.u32 3, %s7
          %s86 = smul.addr %s85, 8
          %s87 = scalar_lea.vmem %s0, %s86
          // Predicated region
          $region21: #{maxpool2d_ceil.1} parent=19 // pred_check
            _
          $region22: #{maxpool2d_ceil.1} parent=19 // pred_check_branch
            %89 = sbr.rel (0) target = $region24
          $region23: #{maxpool2d_ceil.1} parent=19 // pred_region
            // Predicated region
            $region25: #{maxpool2d_ceil.1} parent=23 // pred_check
              _
            $region26: #{maxpool2d_ceil.1} parent=23 // pred_check_branch
              %91 = sbr.rel (0) target = $region28
            $region27: #{maxpool2d_ceil.1} parent=23 // pred_region
              // Predicated region
              $region40: #{maxpool2d_ceil.1} parent=27 // pred_check
                _
              $region41: #{maxpool2d_ceil.1} parent=27 // pred_check_branch
                %158 = sbr.rel (0) target = $region43
              $region42: #{maxpool2d_ceil.1} parent=27 // pred_region
                loop: start=0, step=1, limit=1
                $region44: #{maxpool2d_ceil.1} parent=42 // loop_pre_header
                  _
                $region45: #{maxpool2d_ceil.1} parent=42 // loop_header
                  %s160 = sphi 0, %s164
                  %p161 = scmp.ge.s32.totalorder %s160, 1
                  %s165 = sphi %s87, %s87
                  %s166 = sphi %s84, %s84
                $region46: #{maxpool2d_ceil.1} parent=42 // loop_header_branch
                  %163 = sbr.rel (%p161) target = $region50
                $region47: #{maxpool2d_ceil.1} parent=42 // loop_body
                  %v167 = vld [vmem:[%s165] sm:$0xff]
                  %168 = vst [vmem:[%s166] sm:$0xff] %v167
                  %v169 = vld [vmem:[%s165 + $0x8] sm:$0xff]
                  %170 = vst [vmem:[%s166 + $0x8] sm:$0xff] %v169
                  %v171 = vld [vmem:[%s165 + $0x10] sm:$0xff]
                  %172 = vst [vmem:[%s166 + $0x10] sm:$0xff] %v171
                  %v173 = vld [vmem:[%s165 + $0x30] sm:$0xff]
                  %174 = vst [vmem:[%s166 + $0x18] sm:$0xff] %v173
                  %v175 = vld [vmem:[%s165 + $0x38] sm:$0xff]
                  %176 = vst [vmem:[%s166 + $0x20] sm:$0xff] %v175
                  %v177 = vld [vmem:[%s165 + $0x40] sm:$0xff]
                  %178 = vst [vmem:[%s166 + $0x28] sm:$0xff] %v177
                  %v179 = vld [vmem:[%s165 + $0x60] sm:$0xff]
                  %180 = vst [vmem:[%s166 + $0x30] sm:$0xff] %v179
                  %v181 = vld [vmem:[%s165 + $0x68] sm:$0xff]
                  %182 = vst [vmem:[%s166 + $0x38] sm:$0xff] %v181
                  %v183 = vld [vmem:[%s165 + $0x70] sm:$0xff]
                  %184 = vst [vmem:[%s166 + $0x40] sm:$0xff] %v183
                  %v185 = vld [vmem:[%s165 + $0x90] sm:$0xff]
                  %186 = vst [vmem:[%s166 + $0x48] sm:$0xff] %v185
                  %v187 = vld [vmem:[%s165 + $0x98] sm:$0xff]
                  %188 = vst [vmem:[%s166 + $0x50] sm:$0xff] %v187
                  %v189 = vld [vmem:[%s165 + $0xa0] sm:$0xff]
                  %190 = vst [vmem:[%s166 + $0x58] sm:$0xff] %v189
                  %v191 = vld [vmem:[%s165 + $0xc0] sm:$0xff]
                  %192 = vst [vmem:[%s166 + $0x60] sm:$0xff] %v191
                  %v193 = vld [vmem:[%s165 + $0xc8] sm:$0xff]
                  %194 = vst [vmem:[%s166 + $0x68] sm:$0xff] %v193
                  %v195 = vld [vmem:[%s165 + $0xd0] sm:$0xff]
                  %196 = vst [vmem:[%s166 + $0x70] sm:$0xff] %v195
                  %v197 = vld [vmem:[%s165 + $0xf0] sm:$0xff]
                  %198 = vst [vmem:[%s166 + $0x78] sm:$0xff] %v197
                  %v199 = vld [vmem:[%s165 + $0xf8] sm:$0xff]
                  %200 = vst [vmem:[%s166 + $0x80] sm:$0xff] %v199
                  %v201 = vld [vmem:[%s165 + $0x100] sm:$0xff]
                  %202 = vst [vmem:[%s166 + $0x88] sm:$0xff] %v201
                  %v203 = vld [vmem:[%s165 + $0x120] sm:$0xff]
                  %204 = vst [vmem:[%s166 + $0x90] sm:$0xff] %v203
                  %v205 = vld [vmem:[%s165 + $0x128] sm:$0xff]
                  %206 = vst [vmem:[%s166 + $0x98] sm:$0xff] %v205
                  %v207 = vld [vmem:[%s165 + $0x130] sm:$0xff]
                  %208 = vst [vmem:[%s166 + $0xa0] sm:$0xff] %v207
                  %v209 = vld [vmem:[%s165 + $0x150] sm:$0xff]
                  %210 = vst [vmem:[%s166 + $0xa8] sm:$0xff] %v209
                  %v211 = vld [vmem:[%s165 + $0x158] sm:$0xff]
                  %212 = vst [vmem:[%s166 + $0xb0] sm:$0xff] %v211
                  %v213 = vld [vmem:[%s165 + $0x160] sm:$0xff]
                  %214 = vst [vmem:[%s166 + $0xb8] sm:$0xff] %v213
                  %v215 = vld [vmem:[%s165 + $0x180] sm:$0xff]
                  %216 = vst [vmem:[%s166 + $0xc0] sm:$0xff] %v215
                  %v217 = vld [vmem:[%s165 + $0x188] sm:$0xff]
                  %218 = vst [vmem:[%s166 + $0xc8] sm:$0xff] %v217
                  %v219 = vld [vmem:[%s165 + $0x190] sm:$0xff]
                  %220 = vst [vmem:[%s166 + $0xd0] sm:$0xff] %v219
                $region48: #{maxpool2d_ceil.1} parent=42 // loop_footer
                  %s164 = sadd.s32 1, %s160
                $region49: #{maxpool2d_ceil.1} parent=42 // loop_footer_branch
                  %159 = sbr.rel target = $region45
                $region50: #{maxpool2d_ceil.1} parent=42 // loop_exit
                  _
              $region43: #{maxpool2d_ceil.1} parent=27 // pred_fallthru
                _
              // Predicated region
              $region51: #{maxpool2d_ceil.1} parent=27 // pred_check
                _
              $region52: #{maxpool2d_ceil.1} parent=27 // pred_check_branch
                %222 = sbr.rel target = $region54
              $region53: #{maxpool2d_ceil.1} parent=27 // pred_region
                _
              $region54: #{maxpool2d_ceil.1} parent=27 // pred_fallthru
                _
            $region28: #{maxpool2d_ceil.1} parent=23 // pred_fallthru
              _
            // Predicated region
            $region29: #{maxpool2d_ceil.1} parent=23 // pred_check
              _
            $region30: #{maxpool2d_ceil.1} parent=23 // pred_check_branch
              %93 = sbr.rel target = $region32
            $region31: #{maxpool2d_ceil.1} parent=23 // pred_region
              loop: start=0, step=1, limit=1
              $region33: #{maxpool2d_ceil.1} parent=31 // loop_pre_header
                _
              $region34: #{maxpool2d_ceil.1} parent=31 // loop_header
                %s96 = sphi 0, %s100
                %p97 = scmp.ge.s32.totalorder %s96, 1
                %s101 = sphi %s87, %s87
                %s102 = sphi %s84, %s84
              $region35: #{maxpool2d_ceil.1} parent=31 // loop_header_branch
                %99 = sbr.rel (%p97) target = $region39
              $region36: #{maxpool2d_ceil.1} parent=31 // loop_body
                %v103 = vld [vmem:[%s101] sm:$0xff]
                %104 = vst [vmem:[%s102] sm:$0xff] %v103
                %v105 = vld [vmem:[%s101 + $0x8] sm:$0xff]
                %106 = vst [vmem:[%s102 + $0x8] sm:$0xff] %v105
                %v107 = vld [vmem:[%s101 + $0x10] sm:$0xff]
                %108 = vst [vmem:[%s102 + $0x10] sm:$0xff] %v107
                %v109 = vld [vmem:[%s101 + $0x30] sm:$0xff]
                %110 = vst [vmem:[%s102 + $0x18] sm:$0xff] %v109
                %v111 = vld [vmem:[%s101 + $0x38] sm:$0xff]
                %112 = vst [vmem:[%s102 + $0x20] sm:$0xff] %v111
                %v113 = vld [vmem:[%s101 + $0x40] sm:$0xff]
                %114 = vst [vmem:[%s102 + $0x28] sm:$0xff] %v113
                %v115 = vld [vmem:[%s101 + $0x60] sm:$0xff]
                %116 = vst [vmem:[%s102 + $0x30] sm:$0xff] %v115
                %v117 = vld [vmem:[%s101 + $0x68] sm:$0xff]
                %118 = vst [vmem:[%s102 + $0x38] sm:$0xff] %v117
                %v119 = vld [vmem:[%s101 + $0x70] sm:$0xff]
                %120 = vst [vmem:[%s102 + $0x40] sm:$0xff] %v119
                %v121 = vld [vmem:[%s101 + $0x90] sm:$0xff]
                %122 = vst [vmem:[%s102 + $0x48] sm:$0xff] %v121
                %v123 = vld [vmem:[%s101 + $0x98] sm:$0xff]
                %124 = vst [vmem:[%s102 + $0x50] sm:$0xff] %v123
                %v125 = vld [vmem:[%s101 + $0xa0] sm:$0xff]
                %126 = vst [vmem:[%s102 + $0x58] sm:$0xff] %v125
                %v127 = vld [vmem:[%s101 + $0xc0] sm:$0xff]
                %128 = vst [vmem:[%s102 + $0x60] sm:$0xff] %v127
                %v129 = vld [vmem:[%s101 + $0xc8] sm:$0xff]
                %130 = vst [vmem:[%s102 + $0x68] sm:$0xff] %v129
                %v131 = vld [vmem:[%s101 + $0xd0] sm:$0xff]
                %132 = vst [vmem:[%s102 + $0x70] sm:$0xff] %v131
                %v133 = vld [vmem:[%s101 + $0xf0] sm:$0xff]
                %134 = vst [vmem:[%s102 + $0x78] sm:$0xff] %v133
                %v135 = vld [vmem:[%s101 + $0xf8] sm:$0xff]
                %136 = vst [vmem:[%s102 + $0x80] sm:$0xff] %v135
                %v137 = vld [vmem:[%s101 + $0x100] sm:$0xff]
                %138 = vst [vmem:[%s102 + $0x88] sm:$0xff] %v137
                %v139 = vld [vmem:[%s101 + $0x120] sm:$0xff]
                %140 = vst [vmem:[%s102 + $0x90] sm:$0xff] %v139
                %v141 = vld [vmem:[%s101 + $0x128] sm:$0xff]
                %142 = vst [vmem:[%s102 + $0x98] sm:$0xff] %v141
                %v143 = vld [vmem:[%s101 + $0x130] sm:$0xff]
                %144 = vst [vmem:[%s102 + $0xa0] sm:$0xff] %v143
                %v145 = vld [vmem:[%s101 + $0x150] sm:$0xff]
                %146 = vst [vmem:[%s102 + $0xa8] sm:$0xff] %v145
                %v147 = vld [vmem:[%s101 + $0x158] sm:$0xff]
                %148 = vst [vmem:[%s102 + $0xb0] sm:$0xff] %v147
                %v149 = vld [vmem:[%s101 + $0x160] sm:$0xff]
                %150 = vst [vmem:[%s102 + $0xb8] sm:$0xff] %v149
                %v151 = vld [vmem:[%s101 + $0x180] sm:$0xff]
                %152 = vst [vmem:[%s102 + $0xc0] sm:$0xff] %v151
                %v153 = vld [vmem:[%s101 + $0x188] sm:$0xff]
                %154 = vst [vmem:[%s102 + $0xc8] sm:$0xff] %v153
                %v155 = vld [vmem:[%s101 + $0x190] sm:$0xff]
                %156 = vst [vmem:[%s102 + $0xd0] sm:$0xff] %v155
              $region37: #{maxpool2d_ceil.1} parent=31 // loop_footer
                %s100 = sadd.s32 1, %s96
              $region38: #{maxpool2d_ceil.1} parent=31 // loop_footer_branch
                %95 = sbr.rel target = $region34
              $region39: #{maxpool2d_ceil.1} parent=31 // loop_exit
                _
            $region32: #{maxpool2d_ceil.1} parent=23 // pred_fallthru
              _
          $region24: #{maxpool2d_ceil.1} parent=19 // pred_fallthru
            _
          %223 = vnop
        $region20: #{maxpool2d_ceil.1} parent=15 // pred_fallthru
          _
      $region16: #{maxpool2d_ceil.1} parent=5 // pred_fallthru
        _
      %p224 = scmp.le.s32.totalorder 1, %s7
      %p225 = scmp.lt.s32.totalorder %s7, 3
      %p226 = pnand %p224, %p225
      %p227 = pneg %p226
      // Predicated region
      $region55: #{maxpool2d_ceil.1} parent=5 // pred_check
        _
      $region56: #{maxpool2d_ceil.1} parent=5 // pred_check_branch
        %229 = sbr.rel (%p226) target = $region58
      $region57: #{maxpool2d_ceil.1} parent=5 // pred_region
        %s230 = ssub.s32 %s7, 1
        %s231 = sand.u32 %s20, 1
        %s232 = sand.u32 %s20, 1
        %s233 = smul.addr %s232, 216
        %s234 = scalar_lea.vmem [#allocation2], %s233
        // Predicated region
        $region59: #{maxpool2d_ceil.1} parent=57 // pred_check
          %p235 = pneg %p33
        $region60: #{maxpool2d_ceil.1} parent=57 // pred_check_branch
          %237 = sbr.rel (%p235) target = $region62
        $region61: #{maxpool2d_ceil.1} parent=57 // pred_region
          _
        $region62: #{maxpool2d_ceil.1} parent=57 // pred_fallthru
          _
        %s238 = sand.u32 %s20, 1
        %s239 = sand.u32 %s20, 1
        %s240 = smul.addr %s239, 216
        %s241 = scalar_lea.vmem [#allocation2], %s240
        %p242 = pneg %p33
        %p243 = pneg %p30
        %p244 = pneg %p59
        %p245 = pneg %p56
        %s246 = smul.u32 3, %s12
        %p247 = scmp.lt.s32.totalorder %s246, 5
        %s248 = scalar_select %p247, %s246, 5
        %s249 = smul.addr %s248, 8
        %s250 = scalar_lea.vmem %s1, %s249
        %s251 = smul.u32 3, %s12
        %s252 = smul.u32 3, %s12
        %p253 = scmp.lt.s32.totalorder %s252, 5
        %s254 = scalar_select %p253, %s252, 5
        %s255 = smul.addr %s254, 8
        %s256 = scalar_lea.vmem %s1, %s255
        %s257 = smul.u32 3, %s12
        %v258 = vld [vmem:[%s234] sm:$0x3f]
        %v259 = vld [vmem:[%s234 + $0x8] sm:$0x3f]
        %v260 = vld [vmem:[%s234 + $0x10] sm:$0x3f]
        %s261 = scalar_lea.vmem %s234, 24 [#allocation2]
        %v262 = vld [vmem:[%s261] sm:$0x3f]
        %v263 = vld [vmem:[%s261 + $0x8] sm:$0x3f]
        %v264 = vld [vmem:[%s261 + $0x10] sm:$0x3f]
        %v265 = vmax.f32 %v258, %v262
        %v266 = vmax.f32 %v259, %v263
        %v267 = vmax.f32 %v260, %v264
        %s268 = scalar_lea.vmem %s234, 48 [#allocation2]
        %v269 = vld [vmem:[%s268] sm:$0x3f]
        %v270 = vld [vmem:[%s268 + $0x8] sm:$0x3f]
        %v271 = vld [vmem:[%s268 + $0x10] sm:$0x3f]
        %v272 = vmax.f32 %v265, %v269
        %v273 = vmax.f32 %v266, %v270
        %v274 = vmax.f32 %v267, %v271
        %s275 = scalar_lea.vmem %s234, 72 [#allocation2]
        %v276 = vld [vmem:[%s275] sm:$0x3f]
        %v277 = vld [vmem:[%s275 + $0x8] sm:$0x3f]
        %v278 = vld [vmem:[%s275 + $0x10] sm:$0x3f]
        %v279 = vmax.f32 %v272, %v276
        %v280 = vmax.f32 %v273, %v277
        %v281 = vmax.f32 %v274, %v278
        %s282 = scalar_lea.vmem %s234, 96 [#allocation2]
        %v283 = vld [vmem:[%s282] sm:$0x3f]
        %v284 = vld [vmem:[%s282 + $0x8] sm:$0x3f]
        %v285 = vld [vmem:[%s282 + $0x10] sm:$0x3f]
        %v286 = vmax.f32 %v279, %v283
        %v287 = vmax.f32 %v280, %v284
        %v288 = vmax.f32 %v281, %v285
        %s289 = scalar_lea.vmem %s234, 120 [#allocation2]
        %v290 = vld [vmem:[%s289] sm:$0x3f]
        %v291 = vld [vmem:[%s289 + $0x8] sm:$0x3f]
        %v292 = vld [vmem:[%s289 + $0x10] sm:$0x3f]
        %v293 = vmax.f32 %v286, %v290
        %v294 = vmax.f32 %v287, %v291
        %v295 = vmax.f32 %v288, %v292
        %s296 = scalar_lea.vmem %s234, 144 [#allocation2]
        %v297 = vld [vmem:[%s296] sm:$0x3f]
        %v298 = vld [vmem:[%s296 + $0x8] sm:$0x3f]
        %v299 = vld [vmem:[%s296 + $0x10] sm:$0x3f]
        %v300 = vmax.f32 %v293, %v297
        %v301 = vmax.f32 %v294, %v298
        %v302 = vmax.f32 %v295, %v299
        %s303 = scalar_lea.vmem %s234, 168 [#allocation2]
        %v304 = vld [vmem:[%s303] sm:$0x3f]
        %v305 = vld [vmem:[%s303 + $0x8] sm:$0x3f]
        %v306 = vld [vmem:[%s303 + $0x10] sm:$0x3f]
        %v307 = vmax.f32 %v300, %v304
        %v308 = vmax.f32 %v301, %v305
        %v309 = vmax.f32 %v302, %v306
        %s310 = scalar_lea.vmem %s234, 192 [#allocation2]
        %v311 = vld [vmem:[%s310] sm:$0x3f]
        %v312 = vld [vmem:[%s310 + $0x8] sm:$0x3f]
        %v313 = vld [vmem:[%s310 + $0x10] sm:$0x3f]
        %v314 = vmax.f32 %v307, %v311
        %v315 = vmax.f32 %v308, %v312
        %v316 = vmax.f32 %v309, %v313
        %vm317 = vcmask 62464
        %318 = vst.msk [vmem:[%s256] sm:$0x3f] %vm317, %v314
        %319 = vst.msk [vmem:[%s256 + $0x8] sm:$0x3f] %vm317, %v315
        %320 = vst.msk [vmem:[%s256 + $0x10] sm:$0x3f] %vm317, %v316
        %s321 = smul.u32 3, %s12
        %p322 = scmp.lt.s32.totalorder %s321, 5
        %s323 = scalar_select %p322, %s321, 5
        %s324 = smul.addr %s323, 8
        %s325 = scalar_lea.vmem %s1, %s324
        // Predicated region
        $region63: #{maxpool2d_ceil.1} parent=57 // pred_check
          %p326 = pneg %p56
        $region64: #{maxpool2d_ceil.1} parent=57 // pred_check_branch
          %328 = sbr.rel (%p326) target = $region66
        $region65: #{maxpool2d_ceil.1} parent=57 // pred_region
          %s329 = smul.u32 3, %s12
        $region66: #{maxpool2d_ceil.1} parent=57 // pred_fallthru
          _
      $region58: #{maxpool2d_ceil.1} parent=5 // pred_fallthru
        _
      %p330 = scmp.le.s32.totalorder 2, %s7
      // Predicated region
      $region67: #{maxpool2d_ceil.1} parent=5 // pred_check
        %p331 = pneg %p330
      $region68: #{maxpool2d_ceil.1} parent=5 // pred_check_branch
        %333 = sbr.rel (%p331) target = $region70
      $region69: #{maxpool2d_ceil.1} parent=5 // pred_region
        %s334 = ssub.s32 %s7, 2
        // Predicated region
        $region71: #{maxpool2d_ceil.1} parent=69 // pred_check
          %p335 = pneg %p62
        $region72: #{maxpool2d_ceil.1} parent=69 // pred_check_branch
          %337 = sbr.rel (%p335) target = $region74
        $region73: #{maxpool2d_ceil.1} parent=69 // pred_region
          %s338 = smul.u32 3, %s13
          %p339 = scmp.lt.s32.totalorder %s338, 5
          %s340 = scalar_select %p339, %s338, 5
          %s341 = smul.addr %s340, 8
          %s342 = scalar_lea.vmem %s1, %s341
        $region74: #{maxpool2d_ceil.1} parent=69 // pred_fallthru
          _
      $region70: #{maxpool2d_ceil.1} parent=5 // pred_fallthru
        _
    $region6: #{maxpool2d_ceil.1} parent=1 // loop_footer
      %s11 = sadd.s32 1, %s7
    $region7: #{maxpool2d_ceil.1} parent=1 // loop_footer_branch
      %6 = sbr.rel target = $region3
    $region8: #{maxpool2d_ceil.1} parent=1 // loop_exit
      _

</llo_original>
